<compile_context>
chip_gen: v5e
topology: v5e:2x2
jax: 0.10.0
libtpu: 0.0.40
codegen_flags: <defaults>
</compile_context>

<pallas_src>
import math

import jax
import jax.numpy as jnp
from jax.experimental import pallas as pl
from jax.experimental.pallas import tpu as pltpu

_LANE = 128
_SUBLANE = 8
_LOG_2PI = math.log(2.0 * math.pi)
_BATCH_BLOCK_CAP = 512            # safe on v7x's 64 MiB VMEM; v5e/v6e could go 1024
_VMEM_LIMIT = 48 * 1024 * 1024    # <= ~48 MiB fits every generation incl. v7x


def _round_up(n, m):
    return ((n + m - 1) // m) * m


def _pad2(a, rows, cols):
    pr, pc = rows - a.shape[0], cols - a.shape[1]
    if pr == 0 and pc == 0:
        return a
    return jnp.pad(a, ((0, pr), (0, pc)))


def _pad_batch(a, b8):
    a = a.astype(jnp.float32)
    if a.shape[0] == b8:
        return a
    return jnp.pad(a, ((0, b8 - a.shape[0]), (0, 0)))


def _batch_blocking(batch):
    """Batch tile: multiple of 8 rows, capped, and >= 2 blocks so the 'parallel'
    grid axis actually feeds both TensorCores on v7x."""
    b8 = _round_up(batch, _SUBLANE)
    if b8 <= _SUBLANE:
        blk = _SUBLANE
    else:
        blk = min(_BATCH_BLOCK_CAP, _round_up(pl.cdiv(b8, 2), _SUBLANE))
    return b8, blk, pl.cdiv(b8, blk)


# ---------------------------------------------------------------------------
# Kernels
# ---------------------------------------------------------------------------

def _mlp_mean(x, w1, b1, w2, b2):
    # f32 MXU matmuls; tanh on the VPU/EUP.
    h = jnp.tanh(jnp.dot(x, w1, preferred_element_type=jnp.float32) + b1)
    return jnp.dot(h, w2, preferred_element_type=jnp.float32) + b2


def _mean_kernel(x_ref, w1_ref, b1_ref, w2_ref, b2_ref, mean_ref):
    mean = _mlp_mean(x_ref[...], w1_ref[...], b1_ref[...], w2_ref[...], b2_ref[...])
    mean_ref[...] = mean.astype(mean_ref.dtype)


def _logprob_stats(mean, act, nhiv, lpb, stats_shape):
    # diagonal-Gaussian log_prob(action), summed over action dims; packed into a
    # lane-dense (blk, 128) slab (lane 0 = log_prob) so the store is a full-lane vst.
    diff = act.astype(jnp.float32) - mean
    lp = jnp.sum(diff * diff * nhiv + lpb, axis=-1, keepdims=True)
    lane = jax.lax.broadcasted_iota(jnp.int32, stats_shape, 1)
    return jnp.where(lane == 0, lp, 0.0)


def _logprob_kernel(x_ref, act_ref, w1_ref, b1_ref, w2_ref, b2_ref,
                    nhiv_ref, lpb_ref, stats_ref):
    mean = _mlp_mean(x_ref[...], w1_ref[...], b1_ref[...], w2_ref[...], b2_ref[...])
    stats = _logprob_stats(mean, act_ref[...], nhiv_ref[...], lpb_ref[...],
                           stats_ref.shape)
    stats_ref[...] = stats.astype(stats_ref.dtype)


def _fused_kernel(x_ref, act_ref, w1_ref, b1_ref, w2_ref, b2_ref,
                  nhiv_ref, lpb_ref, mean_ref, stats_ref):
    mean = _mlp_mean(x_ref[...], w1_ref[...], b1_ref[...], w2_ref[...], b2_ref[...])
    mean_ref[...] = mean.astype(mean_ref.dtype)
    stats = _logprob_stats(mean, act_ref[...], nhiv_ref[...], lpb_ref[...],
                           stats_ref.shape)
    stats_ref[...] = stats.astype(stats_ref.dtype)


# ---------------------------------------------------------------------------
# jit'd wrappers around pallas_call
# ---------------------------------------------------------------------------

def _compiler_params():
    return pltpu.CompilerParams(
        dimension_semantics=("parallel",),
        vmem_limit_bytes=_VMEM_LIMIT,
    )


@jax.jit
def _forward_mean(x, prep):
    batch, obs_dim = x.shape
    h_pad = prep["w1"].shape[1]
    act_dim = prep["w2"].shape[1]
    b8, blk, grid = _batch_blocking(batch)
    xp = _pad_batch(x, b8)

    mean = pl.pallas_call(
        _mean_kernel,
        out_shape=jax.ShapeDtypeStruct((b8, act_dim), jnp.float32),
        grid=(grid,),
        in_specs=[
            pl.BlockSpec((blk, obs_dim), lambda i: (i, 0)),      # x (pipelined)
            pl.BlockSpec((obs_dim, h_pad), lambda i: (0, 0)),    # W1 (resident)
            pl.BlockSpec((1, h_pad), lambda i: (0, 0)),          # b1
            pl.BlockSpec((h_pad, act_dim), lambda i: (0, 0)),    # W2
            pl.BlockSpec((1, act_dim), lambda i: (0, 0)),        # b2
        ],
        out_specs=pl.BlockSpec((blk, act_dim), lambda i: (i, 0)),
        compiler_params=_compiler_params(),
    )(xp, prep["w1"], prep["b1"], prep["w2"], prep["b2"])
    return mean[:batch] if b8 != batch else mean


@jax.jit
def _log_prob(x, action, prep):
    batch, obs_dim = x.shape
    h_pad = prep["w1"].shape[1]
    act_dim = prep["w2"].shape[1]
    b8, blk, grid = _batch_blocking(batch)
    xp = _pad_batch(x, b8)
    ap = _pad_batch(action, b8)

    stats = pl.pallas_call(
        _logprob_kernel,
        out_shape=jax.ShapeDtypeStruct((b8, _LANE), jnp.float32),
        grid=(grid,),
        in_specs=[
            pl.BlockSpec((blk, obs_dim), lambda i: (i, 0)),      # x (pipelined)
            pl.BlockSpec((blk, act_dim), lambda i: (i, 0)),      # action (pipelined)
            pl.BlockSpec((obs_dim, h_pad), lambda i: (0, 0)),    # W1 (resident)
            pl.BlockSpec((1, h_pad), lambda i: (0, 0)),          # b1
            pl.BlockSpec((h_pad, act_dim), lambda i: (0, 0)),    # W2
            pl.BlockSpec((1, act_dim), lambda i: (0, 0)),        # b2
            pl.BlockSpec((1, act_dim), lambda i: (0, 0)),        # -1/(2 var)
            pl.BlockSpec((1, act_dim), lambda i: (0, 0)),        # -log_std-0.5*log(2pi)
        ],
        out_specs=pl.BlockSpec((blk, _LANE), lambda i: (i, 0)),
        compiler_params=_compiler_params(),
    )(xp, ap, prep["w1"], prep["b1"], prep["w2"], prep["b2"],
      prep["nhiv"], prep["lpb"])
    return stats[:batch, 0:1]


@jax.jit
def _evaluate(x, action, prep):
    batch, obs_dim = x.shape
    h_pad = prep["w1"].shape[1]
    act_dim = prep["w2"].shape[1]
    b8, blk, grid = _batch_blocking(batch)
    xp = _pad_batch(x, b8)
    ap = _pad_batch(action, b8)

    mean, stats = pl.pallas_call(
        _fused_kernel,
        out_shape=(
            jax.ShapeDtypeStruct((b8, act_dim), jnp.float32),
            jax.ShapeDtypeStruct((b8, _LANE), jnp.float32),
        ),
        grid=(grid,),
        in_specs=[
            pl.BlockSpec((blk, obs_dim), lambda i: (i, 0)),
            pl.BlockSpec((blk, act_dim), lambda i: (i, 0)),
            pl.BlockSpec((obs_dim, h_pad), lambda i: (0, 0)),
            pl.BlockSpec((1, h_pad), lambda i: (0, 0)),
            pl.BlockSpec((h_pad, act_dim), lambda i: (0, 0)),
            pl.BlockSpec((1, act_dim), lambda i: (0, 0)),
            pl.BlockSpec((1, act_dim), lambda i: (0, 0)),
            pl.BlockSpec((1, act_dim), lambda i: (0, 0)),
        ],
        out_specs=(
            pl.BlockSpec((blk, act_dim), lambda i: (i, 0)),
            pl.BlockSpec((blk, _LANE), lambda i: (i, 0)),
        ),
        compiler_params=_compiler_params(),
    )(xp, ap, prep["w1"], prep["b1"], prep["w2"], prep["b2"],
      prep["nhiv"], prep["lpb"])
    mean = mean[:batch] if b8 != batch else mean
    return mean, stats[:batch, 0:1]


# ---------------------------------------------------------------------------
# Parameter preparation (done ONCE, outside the per-call path)
# ---------------------------------------------------------------------------

def _prepare_params(params):
    w1 = params["w1"].astype(jnp.float32)
    b1 = params["b1"].astype(jnp.float32)
    w2 = params["w2"].astype(jnp.float32)
    b2 = params["b2"].astype(jnp.float32)
    log_std = params["log_std"].astype(jnp.float32)
    obs_dim, hid = w1.shape
    act_dim = w2.shape[1]
    h_pad = _round_up(hid, _LANE)  # lane-dense hidden; padded lanes are exact zeros
    return {
        "w1": _pad2(w1, obs_dim, h_pad),
        "b1": _pad2(b1.reshape(1, hid), 1, h_pad),
        "w2": _pad2(w2, h_pad, act_dim),
        "b2": b2.reshape(1, act_dim),
        # state-independent Gaussian constants (computed once, not per grid block):
        "nhiv": (-0.5 * jnp.exp(-2.0 * log_std)).reshape(1, act_dim),   # -1/(2 var)
        "lpb": (-log_std - 0.5 * _LOG_2PI).reshape(1, act_dim),
    }


# ---------------------------------------------------------------------------
# Public Policy API (mirrors the PyTorch base class methods)
# ---------------------------------------------------------------------------

class PallasGaussianPolicy:
    def __init__(self, params):
        self.params = params
        self.log_std = params["log_std"].astype(jnp.float32)
        self._prep = _prepare_params(params)

    def forward(self, x):
        """Returns the distribution parameters (mean, log_std)."""
        return _forward_mean(x, self._prep), self.log_std

    def select_action(self, x, mean_action=False, key=None):
        mean, log_std = self.forward(x)
        if mean_action:
            return mean
        if key is None:
            raise ValueError("select_action(mean_action=False) requires a PRNG key")
        noise = jax.random.normal(key, mean.shape, dtype=mean.dtype)
        return mean + jnp.exp(log_std) * noise    # reparameterized sample (glue)

    def get_log_prob(self, x, action):
        return _log_prob(x, action, self._prep)

    def get_kl(self, x):
        # KL(pi || detach(pi)) is identically zero in value; no kernel launch needed.
        # TODO(synk): grad/Fisher-vector semantics through this are zero; true TRPO
        # KL gradients would need the forward mean and a custom VJP.
        return jnp.zeros((x.shape[0], 1), jnp.float32)

    def evaluate(self, x, action):
        """Fused single-launch path for training steps: (mean, log_std, log_prob, kl)."""
        mean, lp = _evaluate(x, action, self._prep)
        return mean, self.log_std, lp, jnp.zeros_like(lp)


# ---------------------------------------------------------------------------
# Deterministic parameter initialization
# ---------------------------------------------------------------------------

def init_params(obs_dim, hidden_dim, act_dim, seed=0):
    k = jax.random.PRNGKey(seed)
    k1, k2, k3, k4 = jax.random.split(k, 4)
    s1 = 1.0 / math.sqrt(obs_dim)
    s2 = 1.0 / math.sqrt(hidden_dim)
    return {
        "w1": jax.random.uniform(k1, (obs_dim, hidden_dim), jnp.float32, -s1, s1),
        "b1": jax.random.uniform(k2, (1, hidden_dim), jnp.float32, -s1, s1),
        "w2": jax.random.uniform(k3, (hidden_dim, act_dim), jnp.float32, -s2, s2),
        "b2": jax.random.uniform(k4, (1, act_dim), jnp.float32, -s2, s2),
        "log_std": jnp.zeros((1, act_dim), jnp.float32),
    }


# ---------------------------------------------------------------------------
# Main
# ---------------------------------------------------------------------------

if __name__ == "__main__":
    batch, obs_dim, hidden_dim, act_dim = 8, 16, 32, 8

    key = jax.random.PRNGKey(0)
    kx, ka, ks = jax.random.split(key, 3)
    x = jax.random.normal(kx, (batch, obs_dim), dtype=jnp.float32)
    action = jax.random.normal(ka, (batch, act_dim), dtype=jnp.float32)

    params = init_params(obs_dim, hidden_dim, act_dim, seed=0)
    policy = PallasGaussianPolicy(params)

    mean, log_std = policy.forward(x)
    a_mean = policy.select_action(x, mean_action=True)
    a_sample = policy.select_action(x, mean_action=False, key=ks)
    lp = policy.get_log_prob(x, action)
    kl = policy.get_kl(x)
    mean_f, log_std_f, lp_f, kl_f = policy.evaluate(x, action)

    jax.block_until_ready((mean, a_mean, a_sample, lp, kl, mean_f, lp_f, kl_f))

    # Sanity checks against a plain-JAX reference.
    h_ref = jnp.tanh(x @ params["w1"] + params["b1"])
    mean_ref = h_ref @ params["w2"] + params["b2"]
    var_ref = jnp.exp(2.0 * params["log_std"])
    lp_ref = jnp.sum(
        -((action - mean_ref) ** 2) / (2.0 * var_ref)
        - params["log_std"] - 0.5 * _LOG_2PI,
        axis=-1, keepdims=True,
    )
    assert mean.shape == (batch, act_dim), "mean shape mismatch"
    assert jnp.allclose(mean, mean_ref, atol=1e-5), "mean mismatch"
    assert jnp.allclose(mean_f, mean_ref, atol=1e-5), "fused mean mismatch"
    assert jnp.allclose(a_mean, mean_ref, atol=1e-5), "mean action mismatch"
    assert lp.shape == (batch, 1), "log_prob shape mismatch"
    assert jnp.allclose(lp, lp_ref, atol=1e-4), "log_prob mismatch"
    assert jnp.allclose(lp_f, lp_ref, atol=1e-4), "fused log_prob mismatch"
    assert kl.shape == (batch, 1), "kl shape mismatch"
    assert jnp.allclose(kl, jnp.zeros_like(kl)), "kl(self||self) != 0"
    assert a_sample.shape == (batch, act_dim)
    assert log_std.shape == (1, act_dim) and log_std_f.shape == (1, act_dim)

    print("KERNEL_OK")
</pallas_src>

<mosaic_0001>
module attributes {stable_mosaic.version = 11 : i64} {
  func.func @_mean_kernel(%arg0: i32, %arg1: memref<8x16xf32, #tpu.memory_space<vmem>>, %arg2: memref<16x128xf32, #tpu.memory_space<vmem>>, %arg3: memref<1x128xf32, #tpu.memory_space<vmem>>, %arg4: memref<128x8xf32, #tpu.memory_space<vmem>>, %arg5: memref<1x8xf32, #tpu.memory_space<vmem>>, %arg6: memref<8x8xf32, #tpu.memory_space<vmem>>) attributes {dimension_semantics = [#tpu.dimension_semantics<parallel>], iteration_bounds = array<i64: 1>, scalar_prefetch = 0 : i64, scratch_operands = 0 : i64, tpu.core_type = #tpu.core_type<tc>, window_params = [{transform_indices = @transform_0, window_bounds = array<i64: 8, 16>}, {pipeline_mode = #tpu.pipeline_mode<synchronous>, transform_indices = @transform_1, window_bounds = array<i64: 16, 128>}, {pipeline_mode = #tpu.pipeline_mode<synchronous>, transform_indices = @transform_2, window_bounds = array<i64: 1, 128>}, {pipeline_mode = #tpu.pipeline_mode<synchronous>, transform_indices = @transform_3, window_bounds = array<i64: 128, 8>}, {pipeline_mode = #tpu.pipeline_mode<synchronous>, transform_indices = @transform_4, window_bounds = array<i64: 1, 8>}, {transform_indices = @transform_5, window_bounds = array<i64: 8, 8>}]} {
    %c0 = arith.constant 0 : index
    %c0_0 = arith.constant 0 : index
    %0 = vector.load %arg1[%c0, %c0_0] : memref<8x16xf32, #tpu.memory_space<vmem>>, vector<8x16xf32>
    %c0_1 = arith.constant 0 : index
    %c0_2 = arith.constant 0 : index
    %1 = vector.load %arg2[%c0_1, %c0_2] : memref<16x128xf32, #tpu.memory_space<vmem>>, vector<16x128xf32>
    %c0_3 = arith.constant 0 : index
    %c0_4 = arith.constant 0 : index
    %2 = vector.load %arg3[%c0_3, %c0_4] : memref<1x128xf32, #tpu.memory_space<vmem>>, vector<1x128xf32>
    %c0_5 = arith.constant 0 : index
    %c0_6 = arith.constant 0 : index
    %3 = vector.load %arg4[%c0_5, %c0_6] : memref<128x8xf32, #tpu.memory_space<vmem>>, vector<128x8xf32>
    %c0_7 = arith.constant 0 : index
    %c0_8 = arith.constant 0 : index
    %4 = vector.load %arg5[%c0_7, %c0_8] : memref<1x8xf32, #tpu.memory_space<vmem>>, vector<1x8xf32>
    %cst = arith.constant dense<0.000000e+00> : vector<8x128xf32>
    %5 = tpu.matmul %0, %1, %cst {dimension_numbers = #tpu.dot_dimension_numbers<[1], [0], [0], [1], [0, 0, 1, 1], [], []>} : vector<8x16xf32>, vector<16x128xf32>, vector<8x128xf32> -> vector<8x128xf32>
    %6 = vector.broadcast %2 : vector<1x128xf32> to vector<8x128xf32>
    %7 = arith.addf %5, %6 : vector<8x128xf32>
    %8 = math.tanh %7 : vector<8x128xf32>
    %cst_9 = arith.constant dense<0.000000e+00> : vector<8x8xf32>
    %9 = tpu.matmul %8, %3, %cst_9 {dimension_numbers = #tpu.dot_dimension_numbers<[1], [0], [0], [1], [0, 0, 1, 1], [], []>} : vector<8x128xf32>, vector<128x8xf32>, vector<8x8xf32> -> vector<8x8xf32>
    %10 = vector.broadcast %4 : vector<1x8xf32> to vector<8x8xf32>
    %11 = arith.addf %9, %10 : vector<8x8xf32>
    %c0_10 = arith.constant 0 : index
    %c0_11 = arith.constant 0 : index
    %12 = vector.load %arg6[%c0_10, %c0_11] : memref<8x8xf32, #tpu.memory_space<vmem>>, vector<8x8xf32>
    tpu.vector_store %arg6[%c0_10, %c0_11], %11 {strides = array<i32>} : memref<8x8xf32, #tpu.memory_space<vmem>>, vector<8x8xf32>,
    return
  }
  func.func @transform_0(%arg0: i32) -> (i32, i32) {
    %c0_i32 = arith.constant 0 : i32
    %c0_i32_0 = arith.constant 0 : i32
    return %arg0, %c0_i32 : i32, i32
  }
  func.func @transform_1(%arg0: i32) -> (i32, i32) {
    %c0_i32 = arith.constant 0 : i32
    %c0_i32_0 = arith.constant 0 : i32
    %c0_i32_1 = arith.constant 0 : i32
    return %c0_i32, %c0_i32_0 : i32, i32
  }
  func.func @transform_2(%arg0: i32) -> (i32, i32) {
    %c0_i32 = arith.constant 0 : i32
    %c0_i32_0 = arith.constant 0 : i32
    %c0_i32_1 = arith.constant 0 : i32
    return %c0_i32, %c0_i32_0 : i32, i32
  }
  func.func @transform_3(%arg0: i32) -> (i32, i32) {
    %c0_i32 = arith.constant 0 : i32
    %c0_i32_0 = arith.constant 0 : i32
    %c0_i32_1 = arith.constant 0 : i32
    return %c0_i32, %c0_i32_0 : i32, i32
  }
  func.func @transform_4(%arg0: i32) -> (i32, i32) {
    %c0_i32 = arith.constant 0 : i32
    %c0_i32_0 = arith.constant 0 : i32
    %c0_i32_1 = arith.constant 0 : i32
    return %c0_i32, %c0_i32_0 : i32, i32
  }
  func.func @transform_5(%arg0: i32) -> (i32, i32) {
    %c0_i32 = arith.constant 0 : i32
    %c0_i32_0 = arith.constant 0 : i32
    return %arg0, %c0_i32 : i32, i32
  }
}

</mosaic_0001>

<llo_original>
// kernel: _forward_mean.1
$region0: #{_forward_mean.1}
  #allocation0 [shape = 'u32[]', space=smem, size = 0x4, offset = 0x4, fixed_abs, tag = 'smem constant byte address 0x4 - core index']
  #allocation1 [shape = 'u32[72,128]{1,0:T(1,128)}', space=vmem, size = 0x9000, scoped, tag = 'internal scratch']
  %s0 = inlined_call_operand.vmem [shape: f32[8,16], index: 0, kind: input, shape index: {}]
  %s1 = inlined_call_operand.vmem [shape: f32[16,128], index: 1, kind: input, shape index: {}]
  %s2 = inlined_call_operand.vmem [shape: f32[1,128], index: 2, kind: input, shape index: {}]
  %s3 = inlined_call_operand.vmem [shape: f32[128,8], index: 3, kind: input, shape index: {}]
  %s4 = inlined_call_operand.vmem [shape: f32[1,8], index: 4, kind: input, shape index: {}]
  %s5 = inlined_call_operand.hbm [shape: f32[8,8], index: 5, kind: output, shape index: {}]
  %s6 = sld [smem:[#allocation0]]
  $region30: #{_forward_mean.1} parent=0
    _
  %s8 = ssub.s32 1, %s6
  %s9 = scalar_select 0, %s8, %s6
  $region1: #{_forward_mean.1} parent=0
    #allocation2 [shape = 'u8[4096]{0}', space=vmem, size = 0x1000, scoped, tag = 'output window, operand 0, single buffered']
    #allocation3 [shape = 's32[1]{0}', space=sflag, size = 0x4, scoped, tag = 'scoped memory for _forward_mean.1']
    %10 = vsyncpa [#allocation3], 0
    // Predicated region
    $region2: #{_forward_mean.1} parent=1 // pred_check
      _
    $region3: #{_forward_mean.1} parent=1 // pred_check_branch
      %12 = sbr.rel (0) target = $region5
    $region4: #{_forward_mean.1} parent=1 // pred_region
      _
    $region5: #{_forward_mean.1} parent=1 // pred_fallthru
      _
    // Predicated region
    $region6: #{_forward_mean.1} parent=1 // pred_check
      _
    $region7: #{_forward_mean.1} parent=1 // pred_check_branch
      %14 = sbr.rel (0) target = $region9
    $region8: #{_forward_mean.1} parent=1 // pred_region
      _
    $region9: #{_forward_mean.1} parent=1 // pred_fallthru
      _
    // Predicated region
    $region10: #{_forward_mean.1} parent=1 // pred_check
      _
    $region11: #{_forward_mean.1} parent=1 // pred_check_branch
      %16 = sbr.rel (0) target = $region13
    $region12: #{_forward_mean.1} parent=1 // pred_region
      _
    $region13: #{_forward_mean.1} parent=1 // pred_fallthru
      _
    // Predicated region
    $region14: #{_forward_mean.1} parent=1 // pred_check
      _
    $region15: #{_forward_mean.1} parent=1 // pred_check_branch
      %18 = sbr.rel (0) target = $region17
    $region16: #{_forward_mean.1} parent=1 // pred_region
      _
    $region17: #{_forward_mean.1} parent=1 // pred_fallthru
      _
    // Predicated region
    $region18: #{_forward_mean.1} parent=1 // pred_check
      _
    $region19: #{_forward_mean.1} parent=1 // pred_check_branch
      %20 = sbr.rel (0) target = $region21
    $region20: #{_forward_mean.1} parent=1 // pred_region
      _
    $region21: #{_forward_mean.1} parent=1 // pred_fallthru
      _
    %v21 = vld [vmem:[%s0] sm:$0xff]
    %v22 = vld [vmem:[%s1] sm:$0xff]
    %v23 = vld [vmem:[%s1 + $0x8] sm:$0xff]
    %v24 = vld [vmem:[%s2] sm:$0x1]
    %v25 = vld [vmem:[%s3] sm:$0xff]
    %v26 = vld [vmem:[%s3 + $0x8] sm:$0xff]
    %v27 = vld [vmem:[%s3 + $0x10] sm:$0xff]
    %v28 = vld [vmem:[%s3 + $0x18] sm:$0xff]
    %v29 = vld [vmem:[%s3 + $0x20] sm:$0xff]
    %v30 = vld [vmem:[%s3 + $0x28] sm:$0xff]
    %v31 = vld [vmem:[%s3 + $0x30] sm:$0xff]
    %v32 = vld [vmem:[%s3 + $0x38] sm:$0xff]
    %v33 = vld [vmem:[%s3 + $0x40] sm:$0xff]
    %v34 = vld [vmem:[%s3 + $0x48] sm:$0xff]
    %v35 = vld [vmem:[%s3 + $0x50] sm:$0xff]
    %v36 = vld [vmem:[%s3 + $0x58] sm:$0xff]
    %v37 = vld [vmem:[%s3 + $0x60] sm:$0xff]
    %v38 = vld [vmem:[%s3 + $0x68] sm:$0xff]
    %v39 = vld [vmem:[%s3 + $0x70] sm:$0xff]
    %v40 = vld [vmem:[%s3 + $0x78] sm:$0xff]
    %v41 = vld [vmem:[%s4] sm:$0x1]
    %v43 = vperm.slane %v24, 0
    %vm45 = vcmask 130048
    %v47 = vsel %vm45, %v21, 0
    %49 = vmatpush.msra.mxu0 0.0
    %50 = vmatpush.msra.mxu0 0.0
    %51 = vmatpush.msra.mxu0 0.0
    %52 = vmatpush.msra.mxu0 0.0
    %53 = vmatpush.msra.mxu0 0.0
    %54 = vmatpush.msra.mxu0 0.0
    %55 = vmatpush.msra.mxu0 0.0
    %56 = vmatpush.msra.mxu0 0.0
    %57 = vmatpush.msra.mxu0 0.0
    %58 = vmatpush.msra.mxu0 0.0
    %59 = vmatpush.msra.mxu0 0.0
    %60 = vmatpush.msra.mxu0 0.0
    %61 = vmatpush.msra.mxu0 0.0
    %62 = vmatpush.msra.mxu0 0.0
    %63 = vmatpush.msra.mxu0 %v23
    %64 = vmatpush.msra.mxu0 %v22
    %65 = vmatmul.f32.gmra.mxu0 %v47
    %v66 = vpop.f32.mrf.mxu0
    %v67 = vadd.f32 %v43, %v66
    %68 = vdwg.mxu0
    %v69 = vtanh.pop %v67
    %v71 = vperm.slane %v41, 0
    %73 = vmatpush.msra.mxu0 %v40
    %74 = vmatpush.msra.mxu0 %v39
    %75 = vmatpush.msra.mxu0 %v38
    %76 = vmatpush.msra.mxu0 %v37
    %77 = vmatpush.msra.mxu0 %v36
    %78 = vmatpush.msra.mxu0 %v35
    %79 = vmatpush.msra.mxu0 %v34
    %80 = vmatpush.msra.mxu0 %v33
    %81 = vmatpush.msra.mxu0 %v32
    %82 = vmatpush.msra.mxu0 %v31
    %83 = vmatpush.msra.mxu0 %v30
    %84 = vmatpush.msra.mxu0 %v29
    %85 = vmatpush.msra.mxu0 %v28
    %86 = vmatpush.msra.mxu0 %v27
    %87 = vmatpush.msra.mxu0 %v26
    %88 = vmatpush.msra.mxu0 %v25
    %89 = vmatmul.f32.gmra.mxu0 %v69
    %v90 = vpop.f32.mrf.mxu0
    %v91 = vadd.f32 %v71, %v90
    %92 = vdwg.mxu0
    %vm93 = vcmask 64512
    %94 = vst.msk [vmem:[#allocation2] sm:$0xff] %vm93, %v91
    // Predicated region
    $region22: #{_forward_mean.1} parent=1 // pred_check
      _
    $region23: #{_forward_mean.1} parent=1 // pred_check_branch
      %96 = sbr.rel (0) target = $region25
    $region24: #{_forward_mean.1} parent=1 // pred_region
      %98 = vsyncadd [#allocation3], 0
      %s100 = sshll.u32 [#allocation2], 4
      %s101 = int_to_ptr.vmem [resolvable:$true] %s100
      %s102 = sshll.u32 %s5, 4
      %s103 = int_to_ptr.hbm [resolvable:$true] %s102
      %105 = dma.vmem_to_hbm [thread:$0]  %s101, 128, %s103, [#allocation3]
    $region25: #{_forward_mean.1} parent=1 // pred_fallthru
      _
    // Predicated region
    $region26: #{_forward_mean.1} parent=1 // pred_check
      _
    $region27: #{_forward_mean.1} parent=1 // pred_check_branch
      %107 = sbr.rel (0) target = $region29
    $region28: #{_forward_mean.1} parent=1 // pred_region
      %109 = dma.done [#allocation3], 128
    $region29: #{_forward_mean.1} parent=1 // pred_fallthru
      _
    %110 = vsyncpa [#allocation3], 1

</llo_original>
